<compile_context>
chip_gen: v6e
topology: v6e:2x2x1
jax: 0.10.0
libtpu: 0.0.40
codegen_flags: <defaults>
</compile_context>

<pallas_src>
import jax
import jax.numpy as jnp
import numpy as np
from jax.experimental import pallas as pl
from jax.experimental.pallas import tpu as pltpu


def _round_up(x, m):
    return ((x + m - 1) // m) * m


# -----------------------------------------------------------------------------
# Kernel: tiled squared-pairwise-distance with running per-destination min.
#   a_ref : (1, Nt, 3)  source-point tile (sublane-major)
#   bt_ref: (1, 3, Mt)  destination-point tile (transposed, lane-dense)
#   o_ref : (1, 1, Mt)  running min_i d2(i, j) for this destination tile
# -----------------------------------------------------------------------------
def _min_dist_kernel(a_ref, bt_ref, o_ref):
    a = a_ref[0]                                    # (Nt, 3)
    bt = bt_ref[0]                                  # (3, Mt)

    # exact f32 direct-difference distances, all on the VPU
    dx = a[:, 0:1] - bt[0:1, :]                     # (Nt, Mt) via broadcast
    dy = a[:, 1:2] - bt[1:2, :]
    dz = a[:, 2:3] - bt[2:3, :]
    d2 = dx * dx + dy * dy + dz * dz                # (Nt, Mt)

    # sublane reduce -> lane-dense (1, Mt) partial min for this source tile
    col_min = jnp.min(d2, axis=0, keepdims=True)

    @pl.when(pl.program_id(2) == 0)
    def _():
        o_ref[0] = col_min

    @pl.when(pl.program_id(2) > 0)
    def _():
        o_ref[0] = jnp.minimum(o_ref[0], col_min)


def min_pairwise_dist_loss(v1, v2, *, squared=False, nt=512, mt=1024):
    """v1: (B, N, 3), v2: (B, M, 3) -> scalar min pairwise distance.

    squared=True  -> min over squared distances
    squared=False -> min over Euclidean distances (single scalar sqrt at the end)
    """
    v1 = v1.astype(jnp.float32)
    v2 = v2.astype(jnp.float32)
    B, N, _ = v1.shape
    M = v2.shape[1]

    # source tile: multiple of 8 sublanes; clamp for small N
    nt = min(nt, _round_up(N, 8))
    n_pad = _round_up(N, nt)

    # destination tile: multiple of 128 lanes; clamp for small M and keep
    # >= 2 "parallel" grid tiles when possible (v7x has 2 TensorCores)
    m_round = _round_up(M, 128)
    mt = min(mt, m_round)
    if B * ((m_round + mt - 1) // mt) < 2 and mt > 128:
        mt = _round_up((m_round + 1) // 2, 128)
    m_pad = _round_up(M, mt)

    # distinct pad constants so padded src/dst pairs are always far apart
    if n_pad != N:
        v1 = jnp.pad(v1, ((0, 0), (0, n_pad - N), (0, 0)), constant_values=1e6)
    if m_pad != M:
        v2 = jnp.pad(v2, ((0, 0), (0, m_pad - M), (0, 0)), constant_values=-1e6)

    v2t = jnp.transpose(v2, (0, 2, 1))              # (B, 3, m_pad), lane-dense

    grid = (B, m_pad // mt, n_pad // nt)            # reduction (N tiles) last
    per_dst_min = pl.pallas_call(
        _min_dist_kernel,
        out_shape=jax.ShapeDtypeStruct((B, 1, m_pad), jnp.float32),
        grid=grid,
        in_specs=[
            pl.BlockSpec((1, nt, 3), lambda b, jm, i: (b, i, 0)),
            pl.BlockSpec((1, 3, mt), lambda b, jm, i: (b, 0, jm)),
        ],
        out_specs=pl.BlockSpec((1, 1, mt), lambda b, jm, i: (b, 0, jm)),
        compiler_params=pltpu.CompilerParams(
            dimension_semantics=("parallel", "parallel", "arbitrary"),
            vmem_limit_bytes=48 * 1024 * 1024),
    )(v1, v2t)

    min_d2 = jnp.min(per_dst_min)                   # tiny XLA epilogue reduce
    return min_d2 if squared else jnp.sqrt(min_d2)


# -----------------------------------------------------------------------------
# Module wrapper mirroring MinDistLoss.
# -----------------------------------------------------------------------------
class MinDistLossPallas:
    def __init__(self, r2r_dist_type="min", squared_dist=False, **kwargs):
        assert r2r_dist_type in ["min"], f"Unknown distance type: {r2r_dist_type}"
        self.squared = squared_dist

    def __call__(self, v1, v2, **args):
        return min_pairwise_dist_loss(v1, v2, squared=self.squared)


# pure-JAX reference (direct (x-y)^2 formula) for correctness checks
def _ref_min_dist(v1, v2, squared=False):
    d2 = jnp.sum((v1[:, :, None, :] - v2[:, None, :, :]) ** 2, axis=-1)
    d = d2 if squared else jnp.sqrt(d2)
    return jnp.min(d)


if __name__ == "__main__":
    key = jax.random.PRNGKey(0)
    k1, k2 = jax.random.split(key, 2)

    B, N, M = 2, 200, 384     # N not a tile multiple -> exercises the pad path
    v1 = jax.random.uniform(k1, (B, N, 3), dtype=jnp.float32)
    v2 = jax.random.uniform(k2, (B, M, 3), dtype=jnp.float32) * 0.9 + 0.05

    # default path (squared_dist=False)
    loss_mod = MinDistLossPallas(r2r_dist_type="min", squared_dist=False)
    loss = loss_mod(v1, v2)
    jax.block_until_ready(loss)
    np.testing.assert_allclose(np.asarray(loss),
                               np.asarray(_ref_min_dist(v1, v2, squared=False)),
                               rtol=1e-4, atol=1e-7)

    # squared path
    loss_sq = MinDistLossPallas(r2r_dist_type="min", squared_dist=True)(v1, v2)
    jax.block_until_ready(loss_sq)
    np.testing.assert_allclose(np.asarray(loss_sq),
                               np.asarray(_ref_min_dist(v1, v2, squared=True)),
                               rtol=1e-4, atol=1e-8)

    print("KERNEL_OK")
</pallas_src>

<mosaic_0001>
module attributes {stable_mosaic.version = 11 : i64} {
  func.func @_min_dist_kernel(%arg0: i32, %arg1: i32, %arg2: i32, %arg3: memref<1x200x3xf32, #tpu.memory_space<vmem>>, %arg4: memref<1x3x384xf32, #tpu.memory_space<vmem>>, %arg5: memref<1x1x384xf32, #tpu.memory_space<vmem>>) attributes {dimension_semantics = [#tpu.dimension_semantics<parallel>, #tpu.dimension_semantics<parallel>, #tpu.dimension_semantics<arbitrary>], iteration_bounds = array<i64: 2, 1, 1>, scalar_prefetch = 0 : i64, scratch_operands = 0 : i64, tpu.core_type = #tpu.core_type<tc>, window_params = [{transform_indices = @transform_0, window_bounds = array<i64: 1, 200, 3>}, {transform_indices = @transform_1, window_bounds = array<i64: 1, 3, 384>}, {transform_indices = @transform_2, window_bounds = array<i64: 1, 1, 384>}]} {
    %c0 = arith.constant 0 : index
    %c0_0 = arith.constant 0 : index
    %c0_1 = arith.constant 0 : index
    %0 = vector.load %arg3[%c0, %c0_0, %c0_1] : memref<1x200x3xf32, #tpu.memory_space<vmem>>, vector<1x200x3xf32>
    %1 = vector.shape_cast %0 : vector<1x200x3xf32> to vector<200x3xf32>
    %c0_2 = arith.constant 0 : index
    %c0_3 = arith.constant 0 : index
    %c0_4 = arith.constant 0 : index
    %2 = vector.load %arg4[%c0_2, %c0_3, %c0_4] : memref<1x3x384xf32, #tpu.memory_space<vmem>>, vector<1x3x384xf32>
    %3 = vector.shape_cast %2 : vector<1x3x384xf32> to vector<3x384xf32>
    %4 = vector.extract_strided_slice %1 {offsets = [0, 0], sizes = [200, 1], strides = [1, 1]} : vector<200x3xf32> to vector<200x1xf32>
    %5 = vector.extract_strided_slice %3 {offsets = [0, 0], sizes = [1, 384], strides = [1, 1]} : vector<3x384xf32> to vector<1x384xf32>
    %6 = vector.broadcast %4 : vector<200x1xf32> to vector<200x384xf32>
    %7 = vector.broadcast %5 : vector<1x384xf32> to vector<200x384xf32>
    %8 = arith.subf %6, %7 : vector<200x384xf32>
    %9 = vector.extract_strided_slice %1 {offsets = [0, 1], sizes = [200, 1], strides = [1, 1]} : vector<200x3xf32> to vector<200x1xf32>
    %10 = vector.extract_strided_slice %3 {offsets = [1, 0], sizes = [1, 384], strides = [1, 1]} : vector<3x384xf32> to vector<1x384xf32>
    %11 = vector.broadcast %9 : vector<200x1xf32> to vector<200x384xf32>
    %12 = vector.broadcast %10 : vector<1x384xf32> to vector<200x384xf32>
    %13 = arith.subf %11, %12 : vector<200x384xf32>
    %14 = vector.extract_strided_slice %1 {offsets = [0, 2], sizes = [200, 1], strides = [1, 1]} : vector<200x3xf32> to vector<200x1xf32>
    %15 = vector.extract_strided_slice %3 {offsets = [2, 0], sizes = [1, 384], strides = [1, 1]} : vector<3x384xf32> to vector<1x384xf32>
    %16 = vector.broadcast %14 : vector<200x1xf32> to vector<200x384xf32>
    %17 = vector.broadcast %15 : vector<1x384xf32> to vector<200x384xf32>
    %18 = arith.subf %16, %17 : vector<200x384xf32>
    %19 = arith.mulf %8, %8 : vector<200x384xf32>
    %20 = arith.mulf %13, %13 : vector<200x384xf32>
    %21 = arith.addf %19, %20 : vector<200x384xf32>
    %22 = arith.mulf %18, %18 : vector<200x384xf32>
    %23 = arith.addf %21, %22 : vector<200x384xf32>
    %cst = arith.constant dense<0x7F800000> : vector<384xf32>
    %24 = vector.multi_reduction <minimumf>, %23, %cst [0] : vector<200x384xf32> to vector<384xf32>
    %25 = vector.shape_cast %24 : vector<384xf32> to vector<1x384xf32>
    %c0_i32 = arith.constant 0 : i32
    %26 = arith.cmpi eq, %arg2, %c0_i32 : i32
    %27 = arith.extui %26 : i1 to i32
    %c0_i32_5 = arith.constant 0 : i32
    %28 = arith.cmpi ne, %27, %c0_i32_5 : i32
    scf.if %28 {
      %c0_8 = arith.constant 0 : index
      %c0_9 = arith.constant 0 : index
      %c0_10 = arith.constant 0 : index
      %32 = vector.load %arg5[%c0_8, %c0_9, %c0_10] : memref<1x1x384xf32, #tpu.memory_space<vmem>>, vector<1x1x384xf32>
      %33 = vector.shape_cast %32 : vector<1x1x384xf32> to vector<1x384xf32>
      %34 = vector.shape_cast %25 : vector<1x384xf32> to vector<1x1x384xf32>
      tpu.vector_store %arg5[%c0_8, %c0_9, %c0_10], %34 {strides = array<i32>} : memref<1x1x384xf32, #tpu.memory_space<vmem>>, vector<1x1x384xf32>,
    } else {
    }
    %c0_i32_6 = arith.constant 0 : i32
    %29 = arith.cmpi sgt, %arg2, %c0_i32_6 : i32
    %30 = arith.extui %29 : i1 to i32
    %c0_i32_7 = arith.constant 0 : i32
    %31 = arith.cmpi ne, %30, %c0_i32_7 : i32
    scf.if %31 {
      %c0_8 = arith.constant 0 : index
      %c0_9 = arith.constant 0 : index
      %c0_10 = arith.constant 0 : index
      %32 = vector.load %arg5[%c0_8, %c0_9, %c0_10] : memref<1x1x384xf32, #tpu.memory_space<vmem>>, vector<1x1x384xf32>
      %33 = vector.shape_cast %32 : vector<1x1x384xf32> to vector<1x384xf32>
      %34 = arith.minimumf %33, %25 : vector<1x384xf32>
      %c0_11 = arith.constant 0 : index
      %c0_12 = arith.constant 0 : index
      %c0_13 = arith.constant 0 : index
      %35 = vector.load %arg5[%c0_11, %c0_12, %c0_13] : memref<1x1x384xf32, #tpu.memory_space<vmem>>, vector<1x1x384xf32>
      %36 = vector.shape_cast %35 : vector<1x1x384xf32> to vector<1x384xf32>
      %37 = vector.shape_cast %34 : vector<1x384xf32> to vector<1x1x384xf32>
      tpu.vector_store %arg5[%c0_11, %c0_12, %c0_13], %37 {strides = array<i32>} : memref<1x1x384xf32, #tpu.memory_space<vmem>>, vector<1x1x384xf32>,
    } else {
    }
    return
  }
  func.func @transform_0(%arg0: i32, %arg1: i32, %arg2: i32) -> (i32, i32, i32) {
    %c0_i32 = arith.constant 0 : i32
    %c0_i32_0 = arith.constant 0 : i32
    return %arg0, %arg2, %c0_i32 : i32, i32, i32
  }
  func.func @transform_1(%arg0: i32, %arg1: i32, %arg2: i32) -> (i32, i32, i32) {
    %c0_i32 = arith.constant 0 : i32
    %c0_i32_0 = arith.constant 0 : i32
    return %arg0, %c0_i32, %arg1 : i32, i32, i32
  }
  func.func @transform_2(%arg0: i32, %arg1: i32, %arg2: i32) -> (i32, i32, i32) {
    %c0_i32 = arith.constant 0 : i32
    %c0_i32_0 = arith.constant 0 : i32
    return %arg0, %c0_i32, %arg1 : i32, i32, i32
  }
}

</mosaic_0001>

<llo_original>
// kernel: tpu_custom_call.1
$region0: #{tpu_custom_call.1}
  #allocation0 [shape = 'u32[]', space=smem, size = 0x4, offset = 0x4, fixed_abs, tag = 'smem constant byte address 0x4 - core index']
  #allocation1 [shape = 'u32[144,128]{1,0:T(1,128)}', space=vmem, size = 0x12000, scoped, tag = 'internal scratch']
  %s0 = inlined_call_operand.vmem [shape: f32[2,200,3], index: 0, kind: input, shape index: {}]
  %s1 = inlined_call_operand.vmem [shape: f32[2,3,384], index: 1, kind: input, shape index: {}]
  %s2 = inlined_call_operand.hbm [shape: f32[2,1,384], index: 2, kind: output, shape index: {}]
  %s3 = sld [smem:[#allocation0]]
  $region49: #{tpu_custom_call.1} parent=0
    _
  %s5 = ssub.s32 1, %s3
  %s6 = scalar_select 0, %s5, %s3
  $region1: #{tpu_custom_call.1} parent=0
    #allocation2 [shape = 'u8[3072]{0}', space=vmem, size = 0xc00, scoped, tag = 'output window, operand 0']
    #allocation3 [shape = 's32[2]{0}', space=sflag, size = 0x8, scoped, tag = 'scoped memory for tpu_custom_call.1']
    %7 = vsyncpa [#allocation3], 0
    %s8 = scalar_lea.sflag [#allocation3], 1
    %9 = vsyncpa %s8, 0
    loop: start=0, step=1, limit=4
    $region2: #{tpu_custom_call.1} parent=1 // loop_pre_header
      _
    $region3: #{tpu_custom_call.1} parent=1 // loop_header
      %s11 = sphi 0, %s15
      %p12 = scmp.ge.s32.totalorder %s11, 4
      %s18 = sphi 0, %s37
      %s19 = sphi 0, %s33
      %s20 = sphi 0, %s29
      %s21 = sphi 0, %s18
      %s22 = sphi 0, %s19
      %s23 = sphi 0, %s20
      %s24 = sphi 0, %s21
      %s25 = sphi 0, %s22
      %s26 = sphi 0, %s23
      %s42 = sphi 0, %s44
      %s45 = sphi 0, %s42
      %s46 = sphi 0, %s45
      %s62 = sphi 0, %s46
      %s70 = sphi 0, %s72
      %s73 = sphi 0, %s70
      %s74 = sphi 0, %s73
      %s90 = sphi 0, %s74
      %s98 = sphi 0, %s100
      %s101 = sphi 0, %s98
      %s102 = sphi 0, %s101
      %s118 = sphi 0, %s102
    $region4: #{tpu_custom_call.1} parent=1 // loop_header_branch
      %14 = sbr.rel (%p12) target = $region8
    $region5: #{tpu_custom_call.1} parent=1 // loop_body
      %s16 = ssub.s32 %s11, 1
      %s17 = ssub.s32 %s11, 2
      %s27 = sadd.s32 1, %s20
      %p28 = scmp.ge.s32.totalorder %s27, 1
      %s29 = scalar_select %p28, 0, %s27
      %s30 = sadd.s32 1, %s19
      %s31 = scalar_select %p28, %s30, %s19
      %p32 = scmp.ge.s32.totalorder %s31, 1
      %s33 = scalar_select %p32, 0, %s31
      %s34 = sadd.s32 1, %s18
      %s35 = scalar_select %p32, %s34, %s18
      %p36 = scmp.ge.s32.totalorder %s35, 2
      %s37 = scalar_select %p36, 0, %s35
      %s38 = ssub.s32 %s18, %s37
      %s39 = ssub.s32 %s20, %s29
      %s40 = sor.u32 %s38, %s39
      %p41 = scmp.eq.s32.totalorder %s40, 0
      %s43 = sadd.s32 %s42, 1
      %s44 = scalar_select %p41, %s42, %s43
      %p47 = pneg %p41
      %p48 = scmp.eq.s32.totalorder %s11, 1
      %p49 = por %p47, %p48
      %p50 = scmp.ne.s32.totalorder %s42, %s45
      %p51 = scmp.eq.s32.totalorder %s11, 0
      %p52 = por %p50, %p51
      %p53 = scmp.ne.s32.totalorder %s42, %s45
      %p54 = scmp.eq.s32.totalorder %s16, 1
      %p55 = por %p53, %p54
      %p56 = scmp.ne.s32.totalorder %s45, %s46
      %p57 = scmp.eq.s32.totalorder %s16, 0
      %p58 = por %p56, %p57
      %p59 = scmp.ne.s32.totalorder %s45, %s46
      %p60 = scmp.eq.s32.totalorder %s17, 1
      %p61 = por %p59, %p60
      %p63 = scmp.ne.s32.totalorder %s46, %s62
      %p64 = scmp.eq.s32.totalorder %s17, 0
      %p65 = por %p63, %p64
      %s66 = ssub.s32 %s18, %s37
      %s67 = ssub.s32 %s19, %s33
      %s68 = sor.u32 %s66, %s67
      %p69 = scmp.eq.s32.totalorder %s68, 0
      %s71 = sadd.s32 %s70, 1
      %s72 = scalar_select %p69, %s70, %s71
      %p75 = pneg %p69
      %p76 = scmp.eq.s32.totalorder %s11, 1
      %p77 = por %p75, %p76
      %p78 = scmp.ne.s32.totalorder %s70, %s73
      %p79 = scmp.eq.s32.totalorder %s11, 0
      %p80 = por %p78, %p79
      %p81 = scmp.ne.s32.totalorder %s70, %s73
      %p82 = scmp.eq.s32.totalorder %s16, 1
      %p83 = por %p81, %p82
      %p84 = scmp.ne.s32.totalorder %s73, %s74
      %p85 = scmp.eq.s32.totalorder %s16, 0
      %p86 = por %p84, %p85
      %p87 = scmp.ne.s32.totalorder %s73, %s74
      %p88 = scmp.eq.s32.totalorder %s17, 1
      %p89 = por %p87, %p88
      %p91 = scmp.ne.s32.totalorder %s74, %s90
      %p92 = scmp.eq.s32.totalorder %s17, 0
      %p93 = por %p91, %p92
      %s94 = ssub.s32 %s18, %s37
      %s95 = ssub.s32 %s19, %s33
      %s96 = sor.u32 %s94, %s95
      %p97 = scmp.eq.s32.totalorder %s96, 0
      %s99 = sadd.s32 %s98, 1
      %s100 = scalar_select %p97, %s98, %s99
      %p103 = pneg %p97
      %p104 = scmp.eq.s32.totalorder %s11, 1
      %p105 = por %p103, %p104
      %p106 = scmp.ne.s32.totalorder %s98, %s101
      %p107 = scmp.eq.s32.totalorder %s11, 0
      %p108 = por %p106, %p107
      %p109 = scmp.ne.s32.totalorder %s98, %s101
      %p110 = scmp.eq.s32.totalorder %s16, 1
      %p111 = por %p109, %p110
      %p112 = scmp.ne.s32.totalorder %s101, %s102
      %p113 = scmp.eq.s32.totalorder %s16, 0
      %p114 = por %p112, %p113
      %p115 = scmp.ne.s32.totalorder %s101, %s102
      %p116 = scmp.eq.s32.totalorder %s17, 1
      %p117 = por %p115, %p116
      %p119 = scmp.ne.s32.totalorder %s102, %s118
      %p120 = scmp.eq.s32.totalorder %s17, 0
      %p121 = por %p119, %p120
      %p122 = scmp.le.s32.totalorder 1, %s11
      %p123 = scmp.lt.s32.totalorder %s11, 3
      %p124 = pnand %p122, %p123
      %p125 = pneg %p124
      // Predicated region
      $region9: #{tpu_custom_call.1} parent=5 // pred_check
        _
      $region10: #{tpu_custom_call.1} parent=5 // pred_check_branch
        %127 = sbr.rel (%p124) target = $region12
      $region11: #{tpu_custom_call.1} parent=5 // pred_region
        %s128 = ssub.s32 %s11, 1
      $region12: #{tpu_custom_call.1} parent=5 // pred_fallthru
        _
      %p129 = scmp.lt.s32.totalorder %s11, 2
      // Predicated region
      $region13: #{tpu_custom_call.1} parent=5 // pred_check
        %p130 = pneg %p129
      $region14: #{tpu_custom_call.1} parent=5 // pred_check_branch
        %132 = sbr.rel (%p130) target = $region16
      $region15: #{tpu_custom_call.1} parent=5 // pred_region
        // Predicated region
        $region17: #{tpu_custom_call.1} parent=15 // pred_check
          %p133 = pneg %p52
        $region18: #{tpu_custom_call.1} parent=15 // pred_check_branch
          %135 = sbr.rel (%p133) target = $region20
        $region19: #{tpu_custom_call.1} parent=15 // pred_region
          %s136 = smul.u32 25, %s20
          %p137 = scmp.lt.s32.totalorder %s18, 1
          %s138 = scalar_select %p137, %s18, 1
          %p139 = scmp.lt.s32.totalorder %s136, 24
          %s140 = scalar_select %p139, %s136, 24
          %s141 = smul.addr %s138, 25
          %s142 = sadd.s32 %s140, %s141
          %s143 = smul.addr %s142, 8
          %s144 = scalar_lea.vmem %s0, %s143
          %s145 = smul.u32 25, %s20
        $region20: #{tpu_custom_call.1} parent=15 // pred_fallthru
          _
        // Predicated region
        $region21: #{tpu_custom_call.1} parent=15 // pred_check
          %p146 = pneg %p80
        $region22: #{tpu_custom_call.1} parent=15 // pred_check_branch
          %148 = sbr.rel (%p146) target = $region24
        $region23: #{tpu_custom_call.1} parent=15 // pred_region
          %s149 = smul.u32 3, %s19
          %p150 = scmp.lt.s32.totalorder %s18, 1
          %s151 = scalar_select %p150, %s18, 1
          %p152 = scmp.lt.s32.totalorder %s149, 2
          %s153 = scalar_select %p152, %s149, 2
          %s154 = smul.addr %s151, 3
          %s155 = sadd.s32 %s153, %s154
          %s156 = smul.addr %s155, 4
          %s157 = scalar_lea.vmem %s1, %s156
          %s158 = smul.u32 3, %s19
        $region24: #{tpu_custom_call.1} parent=15 // pred_fallthru
          _
      $region16: #{tpu_custom_call.1} parent=5 // pred_fallthru
        _
      %p159 = scmp.le.s32.totalorder 1, %s11
      %p160 = scmp.lt.s32.totalorder %s11, 3
      %p161 = pnand %p159, %p160
      %p162 = pneg %p161
      // Predicated region
      $region25: #{tpu_custom_call.1} parent=5 // pred_check
        _
      $region26: #{tpu_custom_call.1} parent=5 // pred_check_branch
        %164 = sbr.rel (%p161) target = $region28
      $region27: #{tpu_custom_call.1} parent=5 // pred_region
        %s165 = ssub.s32 %s11, 1
        %s166 = smul.u32 25, %s23
        %p167 = scmp.lt.s32.totalorder %s21, 1
        %s168 = scalar_select %p167, %s21, 1
        %p169 = scmp.lt.s32.totalorder %s166, 24
        %s170 = scalar_select %p169, %s166, 24
        %s171 = smul.addr %s168, 25
        %s172 = sadd.s32 %s170, %s171
        %s173 = smul.addr %s172, 8
        %s174 = scalar_lea.vmem %s0, %s173
        %p175 = pneg %p58
        %p176 = pneg %p55
        %s177 = smul.u32 3, %s22
        %p178 = scmp.lt.s32.totalorder %s21, 1
        %s179 = scalar_select %p178, %s21, 1
        %p180 = scmp.lt.s32.totalorder %s177, 2
        %s181 = scalar_select %p180, %s177, 2
        %s182 = smul.addr %s179, 3
        %s183 = sadd.s32 %s181, %s182
        %s184 = smul.addr %s183, 4
        %s185 = scalar_lea.vmem %s1, %s184
        %p186 = pneg %p86
        %p187 = pneg %p83
        %p188 = pneg %p114
        %p189 = pneg %p111
        %s190 = sand.u32 %s101, 1
        %s191 = scalar_lea.sflag [#allocation3], %s190
        %s192 = sand.u32 %s101, 1
        %s193 = smul.addr %s192, 3
        %s194 = scalar_lea.vmem [#allocation2], %s193
        %s195 = smul.u32 25, %s23
        %p196 = scmp.lt.s32.totalorder %s21, 1
        %s197 = scalar_select %p196, %s21, 1
        %p198 = scmp.lt.s32.totalorder %s195, 24
        %s199 = scalar_select %p198, %s195, 24
        %s200 = smul.addr %s197, 25
        %s201 = sadd.s32 %s199, %s200
        %s202 = smul.addr %s201, 8
        %s203 = scalar_lea.vmem %s0, %s202
        %s204 = smul.u32 25, %s23
        %s205 = smul.u32 3, %s22
        %p206 = scmp.lt.s32.totalorder %s21, 1
        %s207 = scalar_select %p206, %s21, 1
        %p208 = scmp.lt.s32.totalorder %s205, 2
        %s209 = scalar_select %p208, %s205, 2
        %s210 = smul.addr %s207, 3
        %s211 = sadd.s32 %s209, %s210
        %s212 = smul.addr %s211, 4
        %s213 = scalar_lea.vmem %s1, %s212
        %s214 = smul.u32 3, %s22
        %s215 = smul.u32 3, %s22
        %v216 = vld [vmem:[%s203] sm:$0xff]
        %v217 = vld [vmem:[%s203 + $0x8] sm:$0xff]
        %v218 = vld [vmem:[%s203 + $0x10] sm:$0xff]
        %v219 = vld [vmem:[%s203 + $0x18] sm:$0xff]
        %v220 = vld [vmem:[%s203 + $0x20] sm:$0xff]
        %v221 = vld [vmem:[%s203 + $0x28] sm:$0xff]
        %v222 = vld [vmem:[%s203 + $0x30] sm:$0xff]
        %v223 = vld [vmem:[%s203 + $0x38] sm:$0xff]
        %v224 = vld [vmem:[%s203 + $0x40] sm:$0xff]
        %v225 = vld [vmem:[%s203 + $0x48] sm:$0xff]
        %v226 = vld [vmem:[%s203 + $0x50] sm:$0xff]
        %v227 = vld [vmem:[%s203 + $0x58] sm:$0xff]
        %v228 = vld [vmem:[%s203 + $0x60] sm:$0xff]
        %v229 = vld [vmem:[%s203 + $0x68] sm:$0xff]
        %v230 = vld [vmem:[%s203 + $0x70] sm:$0xff]
        %v231 = vld [vmem:[%s203 + $0x78] sm:$0xff]
        %v232 = vld [vmem:[%s203 + $0x80] sm:$0xff]
        %v233 = vld [vmem:[%s203 + $0x88] sm:$0xff]
        %v234 = vld [vmem:[%s203 + $0x90] sm:$0xff]
        %v235 = vld [vmem:[%s203 + $0x98] sm:$0xff]
        %v236 = vld [vmem:[%s203 + $0xa0] sm:$0xff]
        %v237 = vld [vmem:[%s203 + $0xa8] sm:$0xff]
        %v238 = vld [vmem:[%s203 + $0xb0] sm:$0xff]
        %v239 = vld [vmem:[%s203 + $0xb8] sm:$0xff]
        %v240 = vld [vmem:[%s203 + $0xc0] sm:$0xff]
        %v241 = vld [vmem:[%s213] sm:$0x77]
        %v242 = vld [vmem:[%s213 + $0x8] sm:$0x7]
        %244 = vset.pattern.permute.xlu0 0
        %245 = vperm.xlu0 %244, %v216
        %v246 = vpop.permute.xlu0 %245
        %249 = vset.pattern.permute.xlu0 0
        %250 = vperm.xlu0 %249, %v217
        %v251 = vpop.permute.xlu0 %250
        %254 = vset.pattern.permute.xlu0 0
        %255 = vperm.xlu0 %254, %v218
        %v256 = vpop.permute.xlu0 %255
        %259 = vset.pattern.permute.xlu0 0
        %260 = vperm.xlu0 %259, %v219
        %v261 = vpop.permute.xlu0 %260
        %264 = vset.pattern.permute.xlu0 0
        %265 = vperm.xlu0 %264, %v220
        %v266 = vpop.permute.xlu0 %265
        %269 = vset.pattern.permute.xlu0 0
        %270 = vperm.xlu0 %269, %v221
        %v271 = vpop.permute.xlu0 %270
        %274 = vset.pattern.permute.xlu0 0
        %275 = vperm.xlu0 %274, %v222
        %v276 = vpop.permute.xlu0 %275
        %279 = vset.pattern.permute.xlu0 0
        %280 = vperm.xlu0 %279, %v223
        %v281 = vpop.permute.xlu0 %280
        %284 = vset.pattern.permute.xlu0 0
        %285 = vperm.xlu0 %284, %v224
        %v286 = vpop.permute.xlu0 %285
        %289 = vset.pattern.permute.xlu0 0
        %290 = vperm.xlu0 %289, %v225
        %v291 = vpop.permute.xlu0 %290
        %294 = vset.pattern.permute.xlu0 0
        %295 = vperm.xlu0 %294, %v226
        %v296 = vpop.permute.xlu0 %295
        %299 = vset.pattern.permute.xlu0 0
        %300 = vperm.xlu0 %299, %v227
        %v301 = vpop.permute.xlu0 %300
        %304 = vset.pattern.permute.xlu0 0
        %305 = vperm.xlu0 %304, %v228
        %v306 = vpop.permute.xlu0 %305
        %309 = vset.pattern.permute.xlu0 0
        %310 = vperm.xlu0 %309, %v229
        %v311 = vpop.permute.xlu0 %310
        %314 = vset.pattern.permute.xlu0 0
        %315 = vperm.xlu0 %314, %v230
        %v316 = vpop.permute.xlu0 %315
        %319 = vset.pattern.permute.xlu0 0
        %320 = vperm.xlu0 %319, %v231
        %v321 = vpop.permute.xlu0 %320
        %324 = vset.pattern.permute.xlu0 0
        %325 = vperm.xlu0 %324, %v232
        %v326 = vpop.permute.xlu0 %325
        %329 = vset.pattern.permute.xlu0 0
        %330 = vperm.xlu0 %329, %v233
        %v331 = vpop.permute.xlu0 %330
        %334 = vset.pattern.permute.xlu0 0
        %335 = vperm.xlu0 %334, %v234
        %v336 = vpop.permute.xlu0 %335
        %339 = vset.pattern.permute.xlu0 0
        %340 = vperm.xlu0 %339, %v235
        %v341 = vpop.permute.xlu0 %340
        %344 = vset.pattern.permute.xlu0 0
        %345 = vperm.xlu0 %344, %v236
        %v346 = vpop.permute.xlu0 %345
        %349 = vset.pattern.permute.xlu0 0
        %350 = vperm.xlu0 %349, %v237
        %v351 = vpop.permute.xlu0 %350
        %354 = vset.pattern.permute.xlu0 0
        %355 = vperm.xlu0 %354, %v238
        %v356 = vpop.permute.xlu0 %355
        %359 = vset.pattern.permute.xlu0 0
        %360 = vperm.xlu0 %359, %v239
        %v361 = vpop.permute.xlu0 %360
        %364 = vset.pattern.permute.xlu0 0
        %365 = vperm.xlu0 %364, %v240
        %v366 = vpop.permute.xlu0 %365
        %v370 = vlaneseq
        %v371 = vshrl.u32 %v370, 7
        %v372 = vsub.s32 0, %v371
        %v373 = vrot.slane %v241, %v372
        %v374 = vlaneseq
        %v375 = vshrl.u32 %v374, 7
        %v376 = vsub.s32 4, %v375
        %v377 = vrot.slane %v241, %v376
        %v378 = vlaneseq
        %v379 = vshrl.u32 %v378, 7
        %v380 = vsub.s32 0, %v379
        %v381 = vrot.slane %v242, %v380
        %v385 = vlaneseq
        %v386 = vshrl.u32 %v385, 7
        %v387 = vsub.s32 0, %v386
        %v388 = vrot.slane %v373, %v387
        %v389 = vlaneseq
        %v390 = vshrl.u32 %v389, 7
        %v391 = vsub.s32 0, %v390
        %v392 = vrot.slane %v377, %v391
        %v393 = vlaneseq
        %v394 = vshrl.u32 %v393, 7
        %v395 = vsub.s32 0, %v394
        %v396 = vrot.slane %v381, %v395
        %v397 = vsub.f32 %v246, %v388
        %v398 = vsub.f32 %v246, %v392
        %v399 = vsub.f32 %v246, %v396
        %v400 = vsub.f32 %v251, %v388
        %v401 = vsub.f32 %v251, %v392
        %v402 = vsub.f32 %v251, %v396
        %v403 = vsub.f32 %v256, %v388
        %v404 = vsub.f32 %v256, %v392
        %v405 = vsub.f32 %v256, %v396
        %v406 = vsub.f32 %v261, %v388
        %v407 = vsub.f32 %v261, %v392
        %v408 = vsub.f32 %v261, %v396
        %v409 = vsub.f32 %v266, %v388
        %v410 = vsub.f32 %v266, %v392
        %v411 = vsub.f32 %v266, %v396
        %v412 = vsub.f32 %v271, %v388
        %v413 = vsub.f32 %v271, %v392
        %v414 = vsub.f32 %v271, %v396
        %v415 = vsub.f32 %v276, %v388
        %v416 = vsub.f32 %v276, %v392
        %v417 = vsub.f32 %v276, %v396
        %v418 = vsub.f32 %v281, %v388
        %v419 = vsub.f32 %v281, %v392
        %v420 = vsub.f32 %v281, %v396
        %v421 = vsub.f32 %v286, %v388
        %v422 = vsub.f32 %v286, %v392
        %v423 = vsub.f32 %v286, %v396
        %v424 = vsub.f32 %v291, %v388
        %v425 = vsub.f32 %v291, %v392
        %v426 = vsub.f32 %v291, %v396
        %v427 = vsub.f32 %v296, %v388
        %v428 = vsub.f32 %v296, %v392
        %v429 = vsub.f32 %v296, %v396
        %v430 = vsub.f32 %v301, %v388
        %v431 = vsub.f32 %v301, %v392
        %v432 = vsub.f32 %v301, %v396
        %v433 = vsub.f32 %v306, %v388
        %v434 = vsub.f32 %v306, %v392
        %v435 = vsub.f32 %v306, %v396
        %v436 = vsub.f32 %v311, %v388
        %v437 = vsub.f32 %v311, %v392
        %v438 = vsub.f32 %v311, %v396
        %v439 = vsub.f32 %v316, %v388
        %v440 = vsub.f32 %v316, %v392
        %v441 = vsub.f32 %v316, %v396
        %v442 = vsub.f32 %v321, %v388
        %v443 = vsub.f32 %v321, %v392
        %v444 = vsub.f32 %v321, %v396
        %v445 = vsub.f32 %v326, %v388
        %v446 = vsub.f32 %v326, %v392
        %v447 = vsub.f32 %v326, %v396
        %v448 = vsub.f32 %v331, %v388
        %v449 = vsub.f32 %v331, %v392
        %v450 = vsub.f32 %v331, %v396
        %v451 = vsub.f32 %v336, %v388
        %v452 = vsub.f32 %v336, %v392
        %v453 = vsub.f32 %v336, %v396
        %v454 = vsub.f32 %v341, %v388
        %v455 = vsub.f32 %v341, %v392
        %v456 = vsub.f32 %v341, %v396
        %v457 = vsub.f32 %v346, %v388
        %v458 = vsub.f32 %v346, %v392
        %v459 = vsub.f32 %v346, %v396
        %v460 = vsub.f32 %v351, %v388
        %v461 = vsub.f32 %v351, %v392
        %v462 = vsub.f32 %v351, %v396
        %v463 = vsub.f32 %v356, %v388
        %v464 = vsub.f32 %v356, %v392
        %v465 = vsub.f32 %v356, %v396
        %v466 = vsub.f32 %v361, %v388
        %v467 = vsub.f32 %v361, %v392
        %v468 = vsub.f32 %v361, %v396
        %v469 = vsub.f32 %v366, %v388
        %v470 = vsub.f32 %v366, %v392
        %v471 = vsub.f32 %v366, %v396
        %472 = vset.pattern.permute.xlu0 1
        %473 = vperm.xlu0 %472, %v216
        %v474 = vpop.permute.xlu0 %473
        %476 = vset.pattern.permute.xlu0 1
        %477 = vperm.xlu0 %476, %v217
        %v478 = vpop.permute.xlu0 %477
        %480 = vset.pattern.permute.xlu0 1
        %481 = vperm.xlu0 %480, %v218
        %v482 = vpop.permute.xlu0 %481
        %484 = vset.pattern.permute.xlu0 1
        %485 = vperm.xlu0 %484, %v219
        %v486 = vpop.permute.xlu0 %485
        %488 = vset.pattern.permute.xlu0 1
        %489 = vperm.xlu0 %488, %v220
        %v490 = vpop.permute.xlu0 %489
        %492 = vset.pattern.permute.xlu0 1
        %493 = vperm.xlu0 %492, %v221
        %v494 = vpop.permute.xlu0 %493
        %496 = vset.pattern.permute.xlu0 1
        %497 = vperm.xlu0 %496, %v222
        %v498 = vpop.permute.xlu0 %497
        %500 = vset.pattern.permute.xlu0 1
        %501 = vperm.xlu0 %500, %v223
        %v502 = vpop.permute.xlu0 %501
        %504 = vset.pattern.permute.xlu0 1
        %505 = vperm.xlu0 %504, %v224
        %v506 = vpop.permute.xlu0 %505
        %508 = vset.pattern.permute.xlu0 1
        %509 = vperm.xlu0 %508, %v225
        %v510 = vpop.permute.xlu0 %509
        %512 = vset.pattern.permute.xlu0 1
        %513 = vperm.xlu0 %512, %v226
        %v514 = vpop.permute.xlu0 %513
        %516 = vset.pattern.permute.xlu0 1
        %517 = vperm.xlu0 %516, %v227
        %v518 = vpop.permute.xlu0 %517
        %520 = vset.pattern.permute.xlu0 1
        %521 = vperm.xlu0 %520, %v228
        %v522 = vpop.permute.xlu0 %521
        %524 = vset.pattern.permute.xlu0 1
        %525 = vperm.xlu0 %524, %v229
        %v526 = vpop.permute.xlu0 %525
        %528 = vset.pattern.permute.xlu0 1
        %529 = vperm.xlu0 %528, %v230
        %v530 = vpop.permute.xlu0 %529
        %532 = vset.pattern.permute.xlu0 1
        %533 = vperm.xlu0 %532, %v231
        %v534 = vpop.permute.xlu0 %533
        %536 = vset.pattern.permute.xlu0 1
        %537 = vperm.xlu0 %536, %v232
        %v538 = vpop.permute.xlu0 %537
        %540 = vset.pattern.permute.xlu0 1
        %541 = vperm.xlu0 %540, %v233
        %v542 = vpop.permute.xlu0 %541
        %544 = vset.pattern.permute.xlu0 1
        %545 = vperm.xlu0 %544, %v234
        %v546 = vpop.permute.xlu0 %545
        %548 = vset.pattern.permute.xlu0 1
        %549 = vperm.xlu0 %548, %v235
        %v550 = vpop.permute.xlu0 %549
        %552 = vset.pattern.permute.xlu0 1
        %553 = vperm.xlu0 %552, %v236
        %v554 = vpop.permute.xlu0 %553
        %556 = vset.pattern.permute.xlu0 1
        %557 = vperm.xlu0 %556, %v237
        %v558 = vpop.permute.xlu0 %557
        %560 = vset.pattern.permute.xlu0 1
        %561 = vperm.xlu0 %560, %v238
        %v562 = vpop.permute.xlu0 %561
        %564 = vset.pattern.permute.xlu0 1
        %565 = vperm.xlu0 %564, %v239
        %v566 = vpop.permute.xlu0 %565
        %568 = vset.pattern.permute.xlu0 1
        %569 = vperm.xlu0 %568, %v240
        %v570 = vpop.permute.xlu0 %569
        %v572 = vlaneseq
        %v573 = vshrl.u32 %v572, 7
        %v574 = vsub.s32 1, %v573
        %v575 = vrot.slane %v241, %v574
        %v576 = vlaneseq
        %v577 = vshrl.u32 %v576, 7
        %v578 = vsub.s32 5, %v577
        %v579 = vrot.slane %v241, %v578
        %v580 = vlaneseq
        %v581 = vshrl.u32 %v580, 7
        %v582 = vsub.s32 1, %v581
        %v583 = vrot.slane %v242, %v582
        %v587 = vlaneseq
        %v588 = vshrl.u32 %v587, 7
        %v589 = vsub.s32 1, %v588
        %v590 = vrot.slane %v575, %v589
        %v591 = vlaneseq
        %v592 = vshrl.u32 %v591, 7
        %v593 = vsub.s32 1, %v592
        %v594 = vrot.slane %v579, %v593
        %v595 = vlaneseq
        %v596 = vshrl.u32 %v595, 7
        %v597 = vsub.s32 1, %v596
        %v598 = vrot.slane %v583, %v597
        %v599 = vsub.f32 %v474, %v590
        %v600 = vsub.f32 %v474, %v594
        %v601 = vsub.f32 %v474, %v598
        %v602 = vsub.f32 %v478, %v590
        %v603 = vsub.f32 %v478, %v594
        %v604 = vsub.f32 %v478, %v598
        %v605 = vsub.f32 %v482, %v590
        %v606 = vsub.f32 %v482, %v594
        %v607 = vsub.f32 %v482, %v598
        %v608 = vsub.f32 %v486, %v590
        %v609 = vsub.f32 %v486, %v594
        %v610 = vsub.f32 %v486, %v598
        %v611 = vsub.f32 %v490, %v590
        %v612 = vsub.f32 %v490, %v594
        %v613 = vsub.f32 %v490, %v598
        %v614 = vsub.f32 %v494, %v590
        %v615 = vsub.f32 %v494, %v594
        %v616 = vsub.f32 %v494, %v598
        %v617 = vsub.f32 %v498, %v590
        %v618 = vsub.f32 %v498, %v594
        %v619 = vsub.f32 %v498, %v598
        %v620 = vsub.f32 %v502, %v590
        %v621 = vsub.f32 %v502, %v594
        %v622 = vsub.f32 %v502, %v598
        %v623 = vsub.f32 %v506, %v590
        %v624 = vsub.f32 %v506, %v594
        %v625 = vsub.f32 %v506, %v598
        %v626 = vsub.f32 %v510, %v590
        %v627 = vsub.f32 %v510, %v594
        %v628 = vsub.f32 %v510, %v598
        %v629 = vsub.f32 %v514, %v590
        %v630 = vsub.f32 %v514, %v594
        %v631 = vsub.f32 %v514, %v598
        %v632 = vsub.f32 %v518, %v590
        %v633 = vsub.f32 %v518, %v594
        %v634 = vsub.f32 %v518, %v598
        %v635 = vsub.f32 %v522, %v590
        %v636 = vsub.f32 %v522, %v594
        %v637 = vsub.f32 %v522, %v598
        %v638 = vsub.f32 %v526, %v590
        %v639 = vsub.f32 %v526, %v594
        %v640 = vsub.f32 %v526, %v598
        %v641 = vsub.f32 %v530, %v590
        %v642 = vsub.f32 %v530, %v594
        %v643 = vsub.f32 %v530, %v598
        %v644 = vsub.f32 %v534, %v590
        %v645 = vsub.f32 %v534, %v594
        %v646 = vsub.f32 %v534, %v598
        %v647 = vsub.f32 %v538, %v590
        %v648 = vsub.f32 %v538, %v594
        %v649 = vsub.f32 %v538, %v598
        %v650 = vsub.f32 %v542, %v590
        %v651 = vsub.f32 %v542, %v594
        %v652 = vsub.f32 %v542, %v598
        %v653 = vsub.f32 %v546, %v590
        %v654 = vsub.f32 %v546, %v594
        %v655 = vsub.f32 %v546, %v598
        %v656 = vsub.f32 %v550, %v590
        %v657 = vsub.f32 %v550, %v594
        %v658 = vsub.f32 %v550, %v598
        %v659 = vsub.f32 %v554, %v590
        %v660 = vsub.f32 %v554, %v594
        %v661 = vsub.f32 %v554, %v598
        %v662 = vsub.f32 %v558, %v590
        %v663 = vsub.f32 %v558, %v594
        %v664 = vsub.f32 %v558, %v598
        %v665 = vsub.f32 %v562, %v590
        %v666 = vsub.f32 %v562, %v594
        %v667 = vsub.f32 %v562, %v598
        %v668 = vsub.f32 %v566, %v590
        %v669 = vsub.f32 %v566, %v594
        %v670 = vsub.f32 %v566, %v598
        %v671 = vsub.f32 %v570, %v590
        %v672 = vsub.f32 %v570, %v594
        %v673 = vsub.f32 %v570, %v598
        %674 = vset.pattern.permute.xlu0 2
        %675 = vperm.xlu0 %674, %v216
        %v676 = vpop.permute.xlu0 %675
        %678 = vset.pattern.permute.xlu0 2
        %679 = vperm.xlu0 %678, %v217
        %v680 = vpop.permute.xlu0 %679
        %682 = vset.pattern.permute.xlu0 2
        %683 = vperm.xlu0 %682, %v218
        %v684 = vpop.permute.xlu0 %683
        %686 = vset.pattern.permute.xlu0 2
        %687 = vperm.xlu0 %686, %v219
        %v688 = vpop.permute.xlu0 %687
        %690 = vset.pattern.permute.xlu0 2
        %691 = vperm.xlu0 %690, %v220
        %v692 = vpop.permute.xlu0 %691
        %694 = vset.pattern.permute.xlu0 2
        %695 = vperm.xlu0 %694, %v221
        %v696 = vpop.permute.xlu0 %695
        %698 = vset.pattern.permute.xlu0 2
        %699 = vperm.xlu0 %698, %v222
        %v700 = vpop.permute.xlu0 %699
        %702 = vset.pattern.permute.xlu0 2
        %703 = vperm.xlu0 %702, %v223
        %v704 = vpop.permute.xlu0 %703
        %706 = vset.pattern.permute.xlu0 2
        %707 = vperm.xlu0 %706, %v224
        %v708 = vpop.permute.xlu0 %707
        %710 = vset.pattern.permute.xlu0 2
        %711 = vperm.xlu0 %710, %v225
        %v712 = vpop.permute.xlu0 %711
        %714 = vset.pattern.permute.xlu0 2
        %715 = vperm.xlu0 %714, %v226
        %v716 = vpop.permute.xlu0 %715
        %718 = vset.pattern.permute.xlu0 2
        %719 = vperm.xlu0 %718, %v227
        %v720 = vpop.permute.xlu0 %719
        %722 = vset.pattern.permute.xlu0 2
        %723 = vperm.xlu0 %722, %v228
        %v724 = vpop.permute.xlu0 %723
        %726 = vset.pattern.permute.xlu0 2
        %727 = vperm.xlu0 %726, %v229
        %v728 = vpop.permute.xlu0 %727
        %730 = vset.pattern.permute.xlu0 2
        %731 = vperm.xlu0 %730, %v230
        %v732 = vpop.permute.xlu0 %731
        %734 = vset.pattern.permute.xlu0 2
        %735 = vperm.xlu0 %734, %v231
        %v736 = vpop.permute.xlu0 %735
        %738 = vset.pattern.permute.xlu0 2
        %739 = vperm.xlu0 %738, %v232
        %v740 = vpop.permute.xlu0 %739
        %742 = vset.pattern.permute.xlu0 2
        %743 = vperm.xlu0 %742, %v233
        %v744 = vpop.permute.xlu0 %743
        %746 = vset.pattern.permute.xlu0 2
        %747 = vperm.xlu0 %746, %v234
        %v748 = vpop.permute.xlu0 %747
        %750 = vset.pattern.permute.xlu0 2
        %751 = vperm.xlu0 %750, %v235
        %v752 = vpop.permute.xlu0 %751
        %754 = vset.pattern.permute.xlu0 2
        %755 = vperm.xlu0 %754, %v236
        %v756 = vpop.permute.xlu0 %755
        %758 = vset.pattern.permute.xlu0 2
        %759 = vperm.xlu0 %758, %v237
        %v760 = vpop.permute.xlu0 %759
        %762 = vset.pattern.permute.xlu0 2
        %763 = vperm.xlu0 %762, %v238
        %v764 = vpop.permute.xlu0 %763
        %766 = vset.pattern.permute.xlu0 2
        %767 = vperm.xlu0 %766, %v239
        %v768 = vpop.permute.xlu0 %767
        %770 = vset.pattern.permute.xlu0 2
        %771 = vperm.xlu0 %770, %v240
        %v772 = vpop.permute.xlu0 %771
        %v774 = vlaneseq
        %v775 = vshrl.u32 %v774, 7
        %v776 = vsub.s32 2, %v775
        %v777 = vrot.slane %v241, %v776
        %v778 = vlaneseq
        %v779 = vshrl.u32 %v778, 7
        %v780 = vsub.s32 6, %v779
        %v781 = vrot.slane %v241, %v780
        %v782 = vlaneseq
        %v783 = vshrl.u32 %v782, 7
        %v784 = vsub.s32 2, %v783
        %v785 = vrot.slane %v242, %v784
        %v789 = vlaneseq
        %v790 = vshrl.u32 %v789, 7
        %v791 = vsub.s32 2, %v790
        %v792 = vrot.slane %v777, %v791
        %v793 = vlaneseq
        %v794 = vshrl.u32 %v793, 7
        %v795 = vsub.s32 2, %v794
        %v796 = vrot.slane %v781, %v795
        %v797 = vlaneseq
        %v798 = vshrl.u32 %v797, 7
        %v799 = vsub.s32 2, %v798
        %v800 = vrot.slane %v785, %v799
        %v801 = vsub.f32 %v676, %v792
        %v802 = vsub.f32 %v676, %v796
        %v803 = vsub.f32 %v676, %v800
        %v804 = vsub.f32 %v680, %v792
        %v805 = vsub.f32 %v680, %v796
        %v806 = vsub.f32 %v680, %v800
        %v807 = vsub.f32 %v684, %v792
        %v808 = vsub.f32 %v684, %v796
        %v809 = vsub.f32 %v684, %v800
        %v810 = vsub.f32 %v688, %v792
        %v811 = vsub.f32 %v688, %v796
        %v812 = vsub.f32 %v688, %v800
        %v813 = vsub.f32 %v692, %v792
        %v814 = vsub.f32 %v692, %v796
        %v815 = vsub.f32 %v692, %v800
        %v816 = vsub.f32 %v696, %v792
        %v817 = vsub.f32 %v696, %v796
        %v818 = vsub.f32 %v696, %v800
        %v819 = vsub.f32 %v700, %v792
        %v820 = vsub.f32 %v700, %v796
        %v821 = vsub.f32 %v700, %v800
        %v822 = vsub.f32 %v704, %v792
        %v823 = vsub.f32 %v704, %v796
        %v824 = vsub.f32 %v704, %v800
        %v825 = vsub.f32 %v708, %v792
        %v826 = vsub.f32 %v708, %v796
        %v827 = vsub.f32 %v708, %v800
        %v828 = vsub.f32 %v712, %v792
        %v829 = vsub.f32 %v712, %v796
        %v830 = vsub.f32 %v712, %v800
        %v831 = vsub.f32 %v716, %v792
        %v832 = vsub.f32 %v716, %v796
        %v833 = vsub.f32 %v716, %v800
        %v834 = vsub.f32 %v720, %v792
        %v835 = vsub.f32 %v720, %v796
        %v836 = vsub.f32 %v720, %v800
        %v837 = vsub.f32 %v724, %v792
        %v838 = vsub.f32 %v724, %v796
        %v839 = vsub.f32 %v724, %v800
        %v840 = vsub.f32 %v728, %v792
        %v841 = vsub.f32 %v728, %v796
        %v842 = vsub.f32 %v728, %v800
        %v843 = vsub.f32 %v732, %v792
        %v844 = vsub.f32 %v732, %v796
        %v845 = vsub.f32 %v732, %v800
        %v846 = vsub.f32 %v736, %v792
        %v847 = vsub.f32 %v736, %v796
        %v848 = vsub.f32 %v736, %v800
        %v849 = vsub.f32 %v740, %v792
        %v850 = vsub.f32 %v740, %v796
        %v851 = vsub.f32 %v740, %v800
        %v852 = vsub.f32 %v744, %v792
        %v853 = vsub.f32 %v744, %v796
        %v854 = vsub.f32 %v744, %v800
        %v855 = vsub.f32 %v748, %v792
        %v856 = vsub.f32 %v748, %v796
        %v857 = vsub.f32 %v748, %v800
        %v858 = vsub.f32 %v752, %v792
        %v859 = vsub.f32 %v752, %v796
        %v860 = vsub.f32 %v752, %v800
        %v861 = vsub.f32 %v756, %v792
        %v862 = vsub.f32 %v756, %v796
        %v863 = vsub.f32 %v756, %v800
        %v864 = vsub.f32 %v760, %v792
        %v865 = vsub.f32 %v760, %v796
        %v866 = vsub.f32 %v760, %v800
        %v867 = vsub.f32 %v764, %v792
        %v868 = vsub.f32 %v764, %v796
        %v869 = vsub.f32 %v764, %v800
        %v870 = vsub.f32 %v768, %v792
        %v871 = vsub.f32 %v768, %v796
        %v872 = vsub.f32 %v768, %v800
        %v873 = vsub.f32 %v772, %v792
        %v874 = vsub.f32 %v772, %v796
        %v875 = vsub.f32 %v772, %v800
        %v876 = vmul.f32 %v397, %v397
        %v877 = vmul.f32 %v398, %v398
        %v878 = vmul.f32 %v399, %v399
        %v879 = vmul.f32 %v400, %v400
        %v880 = vmul.f32 %v401, %v401
        %v881 = vmul.f32 %v402, %v402
        %v882 = vmul.f32 %v403, %v403
        %v883 = vmul.f32 %v404, %v404
        %v884 = vmul.f32 %v405, %v405
        %v885 = vmul.f32 %v406, %v406
        %v886 = vmul.f32 %v407, %v407
        %v887 = vmul.f32 %v408, %v408
        %v888 = vmul.f32 %v409, %v409
        %v889 = vmul.f32 %v410, %v410
        %v890 = vmul.f32 %v411, %v411
        %v891 = vmul.f32 %v412, %v412
        %v892 = vmul.f32 %v413, %v413
        %v893 = vmul.f32 %v414, %v414
        %v894 = vmul.f32 %v415, %v415
        %v895 = vmul.f32 %v416, %v416
        %v896 = vmul.f32 %v417, %v417
        %v897 = vmul.f32 %v418, %v418
        %v898 = vmul.f32 %v419, %v419
        %v899 = vmul.f32 %v420, %v420
        %v900 = vmul.f32 %v421, %v421
        %v901 = vmul.f32 %v422, %v422
        %v902 = vmul.f32 %v423, %v423
        %v903 = vmul.f32 %v424, %v424
        %v904 = vmul.f32 %v425, %v425
        %v905 = vmul.f32 %v426, %v426
        %v906 = vmul.f32 %v427, %v427
        %v907 = vmul.f32 %v428, %v428
        %v908 = vmul.f32 %v429, %v429
        %v909 = vmul.f32 %v430, %v430
        %v910 = vmul.f32 %v431, %v431
        %v911 = vmul.f32 %v432, %v432
        %v912 = vmul.f32 %v433, %v433
        %v913 = vmul.f32 %v434, %v434
        %v914 = vmul.f32 %v435, %v435
        %v915 = vmul.f32 %v436, %v436
        %v916 = vmul.f32 %v437, %v437
        %v917 = vmul.f32 %v438, %v438
        %v918 = vmul.f32 %v439, %v439
        %v919 = vmul.f32 %v440, %v440
        %v920 = vmul.f32 %v441, %v441
        %v921 = vmul.f32 %v442, %v442
        %v922 = vmul.f32 %v443, %v443
        %v923 = vmul.f32 %v444, %v444
        %v924 = vmul.f32 %v445, %v445
        %v925 = vmul.f32 %v446, %v446
        %v926 = vmul.f32 %v447, %v447
        %v927 = vmul.f32 %v448, %v448
        %v928 = vmul.f32 %v449, %v449
        %v929 = vmul.f32 %v450, %v450
        %v930 = vmul.f32 %v451, %v451
        %v931 = vmul.f32 %v452, %v452
        %v932 = vmul.f32 %v453, %v453
        %v933 = vmul.f32 %v454, %v454
        %v934 = vmul.f32 %v455, %v455
        %v935 = vmul.f32 %v456, %v456
        %v936 = vmul.f32 %v457, %v457
        %v937 = vmul.f32 %v458, %v458
        %v938 = vmul.f32 %v459, %v459
        %v939 = vmul.f32 %v460, %v460
        %v940 = vmul.f32 %v461, %v461
        %v941 = vmul.f32 %v462, %v462
        %v942 = vmul.f32 %v463, %v463
        %v943 = vmul.f32 %v464, %v464
        %v944 = vmul.f32 %v465, %v465
        %v945 = vmul.f32 %v466, %v466
        %v946 = vmul.f32 %v467, %v467
        %v947 = vmul.f32 %v468, %v468
        %v948 = vmul.f32 %v469, %v469
        %v949 = vmul.f32 %v470, %v470
        %v950 = vmul.f32 %v471, %v471
        %v951 = vmul.f32 %v599, %v599
        %v952 = vmul.f32 %v600, %v600
        %v953 = vmul.f32 %v601, %v601
        %v954 = vmul.f32 %v602, %v602
        %v955 = vmul.f32 %v603, %v603
        %v956 = vmul.f32 %v604, %v604
        %v957 = vmul.f32 %v605, %v605
        %v958 = vmul.f32 %v606, %v606
        %v959 = vmul.f32 %v607, %v607
        %v960 = vmul.f32 %v608, %v608
        %v961 = vmul.f32 %v609, %v609
        %v962 = vmul.f32 %v610, %v610
        %v963 = vmul.f32 %v611, %v611
        %v964 = vmul.f32 %v612, %v612
        %v965 = vmul.f32 %v613, %v613
        %v966 = vmul.f32 %v614, %v614
        %v967 = vmul.f32 %v615, %v615
        %v968 = vmul.f32 %v616, %v616
        %v969 = vmul.f32 %v617, %v617
        %v970 = vmul.f32 %v618, %v618
        %v971 = vmul.f32 %v619, %v619
        %v972 = vmul.f32 %v620, %v620
        %v973 = vmul.f32 %v621, %v621
        %v974 = vmul.f32 %v622, %v622
        %v975 = vmul.f32 %v623, %v623
        %v976 = vmul.f32 %v624, %v624
        %v977 = vmul.f32 %v625, %v625
        %v978 = vmul.f32 %v626, %v626
        %v979 = vmul.f32 %v627, %v627
        %v980 = vmul.f32 %v628, %v628
        %v981 = vmul.f32 %v629, %v629
        %v982 = vmul.f32 %v630, %v630
        %v983 = vmul.f32 %v631, %v631
        %v984 = vmul.f32 %v632, %v632
        %v985 = vmul.f32 %v633, %v633
        %v986 = vmul.f32 %v634, %v634
        %v987 = vmul.f32 %v635, %v635
        %v988 = vmul.f32 %v636, %v636
        %v989 = vmul.f32 %v637, %v637
        %v990 = vmul.f32 %v638, %v638
        %v991 = vmul.f32 %v639, %v639
        %v992 = vmul.f32 %v640, %v640
        %v993 = vmul.f32 %v641, %v641
        %v994 = vmul.f32 %v642, %v642
        %v995 = vmul.f32 %v643, %v643
        %v996 = vmul.f32 %v644, %v644
        %v997 = vmul.f32 %v645, %v645
        %v998 = vmul.f32 %v646, %v646
        %v999 = vmul.f32 %v647, %v647
        %v1000 = vmul.f32 %v648, %v648
        %v1001 = vmul.f32 %v649, %v649
        %v1002 = vmul.f32 %v650, %v650
        %v1003 = vmul.f32 %v651, %v651
        %v1004 = vmul.f32 %v652, %v652
        %v1005 = vmul.f32 %v653, %v653
        %v1006 = vmul.f32 %v654, %v654
        %v1007 = vmul.f32 %v655, %v655
        %v1008 = vmul.f32 %v656, %v656
        %v1009 = vmul.f32 %v657, %v657
        %v1010 = vmul.f32 %v658, %v658
        %v1011 = vmul.f32 %v659, %v659
        %v1012 = vmul.f32 %v660, %v660
        %v1013 = vmul.f32 %v661, %v661
        %v1014 = vmul.f32 %v662, %v662
        %v1015 = vmul.f32 %v663, %v663
        %v1016 = vmul.f32 %v664, %v664
        %v1017 = vmul.f32 %v665, %v665
        %v1018 = vmul.f32 %v666, %v666
        %v1019 = vmul.f32 %v667, %v667
        %v1020 = vmul.f32 %v668, %v668
        %v1021 = vmul.f32 %v669, %v669
        %v1022 = vmul.f32 %v670, %v670
        %v1023 = vmul.f32 %v671, %v671
        %v1024 = vmul.f32 %v672, %v672
        %v1025 = vmul.f32 %v673, %v673
        %v1026 = vadd.f32 %v876, %v951
        %v1027 = vadd.f32 %v877, %v952
        %v1028 = vadd.f32 %v878, %v953
        %v1029 = vadd.f32 %v879, %v954
        %v1030 = vadd.f32 %v880, %v955
        %v1031 = vadd.f32 %v881, %v956
        %v1032 = vadd.f32 %v882, %v957
        %v1033 = vadd.f32 %v883, %v958
        %v1034 = vadd.f32 %v884, %v959
        %v1035 = vadd.f32 %v885, %v960
        %v1036 = vadd.f32 %v886, %v961
        %v1037 = vadd.f32 %v887, %v962
        %v1038 = vadd.f32 %v888, %v963
        %v1039 = vadd.f32 %v889, %v964
        %v1040 = vadd.f32 %v890, %v965
        %v1041 = vadd.f32 %v891, %v966
        %v1042 = vadd.f32 %v892, %v967
        %v1043 = vadd.f32 %v893, %v968
        %v1044 = vadd.f32 %v894, %v969
        %v1045 = vadd.f32 %v895, %v970
        %v1046 = vadd.f32 %v896, %v971
        %v1047 = vadd.f32 %v897, %v972
        %v1048 = vadd.f32 %v898, %v973
        %v1049 = vadd.f32 %v899, %v974
        %v1050 = vadd.f32 %v900, %v975
        %v1051 = vadd.f32 %v901, %v976
        %v1052 = vadd.f32 %v902, %v977
        %v1053 = vadd.f32 %v903, %v978
        %v1054 = vadd.f32 %v904, %v979
        %v1055 = vadd.f32 %v905, %v980
        %v1056 = vadd.f32 %v906, %v981
        %v1057 = vadd.f32 %v907, %v982
        %v1058 = vadd.f32 %v908, %v983
        %v1059 = vadd.f32 %v909, %v984
        %v1060 = vadd.f32 %v910, %v985
        %v1061 = vadd.f32 %v911, %v986
        %v1062 = vadd.f32 %v912, %v987
        %v1063 = vadd.f32 %v913, %v988
        %v1064 = vadd.f32 %v914, %v989
        %v1065 = vadd.f32 %v915, %v990
        %v1066 = vadd.f32 %v916, %v991
        %v1067 = vadd.f32 %v917, %v992
        %v1068 = vadd.f32 %v918, %v993
        %v1069 = vadd.f32 %v919, %v994
        %v1070 = vadd.f32 %v920, %v995
        %v1071 = vadd.f32 %v921, %v996
        %v1072 = vadd.f32 %v922, %v997
        %v1073 = vadd.f32 %v923, %v998
        %v1074 = vadd.f32 %v924, %v999
        %v1075 = vadd.f32 %v925, %v1000
        %v1076 = vadd.f32 %v926, %v1001
        %v1077 = vadd.f32 %v927, %v1002
        %v1078 = vadd.f32 %v928, %v1003
        %v1079 = vadd.f32 %v929, %v1004
        %v1080 = vadd.f32 %v930, %v1005
        %v1081 = vadd.f32 %v931, %v1006
        %v1082 = vadd.f32 %v932, %v1007
        %v1083 = vadd.f32 %v933, %v1008
        %v1084 = vadd.f32 %v934, %v1009
        %v1085 = vadd.f32 %v935, %v1010
        %v1086 = vadd.f32 %v936, %v1011
        %v1087 = vadd.f32 %v937, %v1012
        %v1088 = vadd.f32 %v938, %v1013
        %v1089 = vadd.f32 %v939, %v1014
        %v1090 = vadd.f32 %v940, %v1015
        %v1091 = vadd.f32 %v941, %v1016
        %v1092 = vadd.f32 %v942, %v1017
        %v1093 = vadd.f32 %v943, %v1018
        %v1094 = vadd.f32 %v944, %v1019
        %v1095 = vadd.f32 %v945, %v1020
        %v1096 = vadd.f32 %v946, %v1021
        %v1097 = vadd.f32 %v947, %v1022
        %v1098 = vadd.f32 %v948, %v1023
        %v1099 = vadd.f32 %v949, %v1024
        %v1100 = vadd.f32 %v950, %v1025
        %v1101 = vmul.f32 %v801, %v801
        %v1102 = vmul.f32 %v802, %v802
        %v1103 = vmul.f32 %v803, %v803
        %v1104 = vmul.f32 %v804, %v804
        %v1105 = vmul.f32 %v805, %v805
        %v1106 = vmul.f32 %v806, %v806
        %v1107 = vmul.f32 %v807, %v807
        %v1108 = vmul.f32 %v808, %v808
        %v1109 = vmul.f32 %v809, %v809
        %v1110 = vmul.f32 %v810, %v810
        %v1111 = vmul.f32 %v811, %v811
        %v1112 = vmul.f32 %v812, %v812
        %v1113 = vmul.f32 %v813, %v813
        %v1114 = vmul.f32 %v814, %v814
        %v1115 = vmul.f32 %v815, %v815
        %v1116 = vmul.f32 %v816, %v816
        %v1117 = vmul.f32 %v817, %v817
        %v1118 = vmul.f32 %v818, %v818
        %v1119 = vmul.f32 %v819, %v819
        %v1120 = vmul.f32 %v820, %v820
        %v1121 = vmul.f32 %v821, %v821
        %v1122 = vmul.f32 %v822, %v822
        %v1123 = vmul.f32 %v823, %v823
        %v1124 = vmul.f32 %v824, %v824
        %v1125 = vmul.f32 %v825, %v825
        %v1126 = vmul.f32 %v826, %v826
        %v1127 = vmul.f32 %v827, %v827
        %v1128 = vmul.f32 %v828, %v828
        %v1129 = vmul.f32 %v829, %v829
        %v1130 = vmul.f32 %v830, %v830
        %v1131 = vmul.f32 %v831, %v831
        %v1132 = vmul.f32 %v832, %v832
        %v1133 = vmul.f32 %v833, %v833
        %v1134 = vmul.f32 %v834, %v834
        %v1135 = vmul.f32 %v835, %v835
        %v1136 = vmul.f32 %v836, %v836
        %v1137 = vmul.f32 %v837, %v837
        %v1138 = vmul.f32 %v838, %v838
        %v1139 = vmul.f32 %v839, %v839
        %v1140 = vmul.f32 %v840, %v840
        %v1141 = vmul.f32 %v841, %v841
        %v1142 = vmul.f32 %v842, %v842
        %v1143 = vmul.f32 %v843, %v843
        %v1144 = vmul.f32 %v844, %v844
        %v1145 = vmul.f32 %v845, %v845
        %v1146 = vmul.f32 %v846, %v846
        %v1147 = vmul.f32 %v847, %v847
        %v1148 = vmul.f32 %v848, %v848
        %v1149 = vmul.f32 %v849, %v849
        %v1150 = vmul.f32 %v850, %v850
        %v1151 = vmul.f32 %v851, %v851
        %v1152 = vmul.f32 %v852, %v852
        %v1153 = vmul.f32 %v853, %v853
        %v1154 = vmul.f32 %v854, %v854
        %v1155 = vmul.f32 %v855, %v855
        %v1156 = vmul.f32 %v856, %v856
        %v1157 = vmul.f32 %v857, %v857
        %v1158 = vmul.f32 %v858, %v858
        %v1159 = vmul.f32 %v859, %v859
        %v1160 = vmul.f32 %v860, %v860
        %v1161 = vmul.f32 %v861, %v861
        %v1162 = vmul.f32 %v862, %v862
        %v1163 = vmul.f32 %v863, %v863
        %v1164 = vmul.f32 %v864, %v864
        %v1165 = vmul.f32 %v865, %v865
        %v1166 = vmul.f32 %v866, %v866
        %v1167 = vmul.f32 %v867, %v867
        %v1168 = vmul.f32 %v868, %v868
        %v1169 = vmul.f32 %v869, %v869
        %v1170 = vmul.f32 %v870, %v870
        %v1171 = vmul.f32 %v871, %v871
        %v1172 = vmul.f32 %v872, %v872
        %v1173 = vmul.f32 %v873, %v873
        %v1174 = vmul.f32 %v874, %v874
        %v1175 = vmul.f32 %v875, %v875
        %v1176 = vadd.f32 %v1026, %v1101
        %v1177 = vadd.f32 %v1027, %v1102
        %v1178 = vadd.f32 %v1028, %v1103
        %v1179 = vadd.f32 %v1029, %v1104
        %v1180 = vadd.f32 %v1030, %v1105
        %v1181 = vadd.f32 %v1031, %v1106
        %v1182 = vadd.f32 %v1032, %v1107
        %v1183 = vadd.f32 %v1033, %v1108
        %v1184 = vadd.f32 %v1034, %v1109
        %v1185 = vadd.f32 %v1035, %v1110
        %v1186 = vadd.f32 %v1036, %v1111
        %v1187 = vadd.f32 %v1037, %v1112
        %v1188 = vadd.f32 %v1038, %v1113
        %v1189 = vadd.f32 %v1039, %v1114
        %v1190 = vadd.f32 %v1040, %v1115
        %v1191 = vadd.f32 %v1041, %v1116
        %v1192 = vadd.f32 %v1042, %v1117
        %v1193 = vadd.f32 %v1043, %v1118
        %v1194 = vadd.f32 %v1044, %v1119
        %v1195 = vadd.f32 %v1045, %v1120
        %v1196 = vadd.f32 %v1046, %v1121
        %v1197 = vadd.f32 %v1047, %v1122
        %v1198 = vadd.f32 %v1048, %v1123
        %v1199 = vadd.f32 %v1049, %v1124
        %v1200 = vadd.f32 %v1050, %v1125
        %v1201 = vadd.f32 %v1051, %v1126
        %v1202 = vadd.f32 %v1052, %v1127
        %v1203 = vadd.f32 %v1053, %v1128
        %v1204 = vadd.f32 %v1054, %v1129
        %v1205 = vadd.f32 %v1055, %v1130
        %v1206 = vadd.f32 %v1056, %v1131
        %v1207 = vadd.f32 %v1057, %v1132
        %v1208 = vadd.f32 %v1058, %v1133
        %v1209 = vadd.f32 %v1059, %v1134
        %v1210 = vadd.f32 %v1060, %v1135
        %v1211 = vadd.f32 %v1061, %v1136
        %v1212 = vadd.f32 %v1062, %v1137
        %v1213 = vadd.f32 %v1063, %v1138
        %v1214 = vadd.f32 %v1064, %v1139
        %v1215 = vadd.f32 %v1065, %v1140
        %v1216 = vadd.f32 %v1066, %v1141
        %v1217 = vadd.f32 %v1067, %v1142
        %v1218 = vadd.f32 %v1068, %v1143
        %v1219 = vadd.f32 %v1069, %v1144
        %v1220 = vadd.f32 %v1070, %v1145
        %v1221 = vadd.f32 %v1071, %v1146
        %v1222 = vadd.f32 %v1072, %v1147
        %v1223 = vadd.f32 %v1073, %v1148
        %v1224 = vadd.f32 %v1074, %v1149
        %v1225 = vadd.f32 %v1075, %v1150
        %v1226 = vadd.f32 %v1076, %v1151
        %v1227 = vadd.f32 %v1077, %v1152
        %v1228 = vadd.f32 %v1078, %v1153
        %v1229 = vadd.f32 %v1079, %v1154
        %v1230 = vadd.f32 %v1080, %v1155
        %v1231 = vadd.f32 %v1081, %v1156
        %v1232 = vadd.f32 %v1082, %v1157
        %v1233 = vadd.f32 %v1083, %v1158
        %v1234 = vadd.f32 %v1084, %v1159
        %v1235 = vadd.f32 %v1085, %v1160
        %v1236 = vadd.f32 %v1086, %v1161
        %v1237 = vadd.f32 %v1087, %v1162
        %v1238 = vadd.f32 %v1088, %v1163
        %v1239 = vadd.f32 %v1089, %v1164
        %v1240 = vadd.f32 %v1090, %v1165
        %v1241 = vadd.f32 %v1091, %v1166
        %v1242 = vadd.f32 %v1092, %v1167
        %v1243 = vadd.f32 %v1093, %v1168
        %v1244 = vadd.f32 %v1094, %v1169
        %v1245 = vadd.f32 %v1095, %v1170
        %v1246 = vadd.f32 %v1096, %v1171
        %v1247 = vadd.f32 %v1097, %v1172
        %v1248 = vadd.f32 %v1098, %v1173
        %v1249 = vadd.f32 %v1099, %v1174
        %v1250 = vadd.f32 %v1100, %v1175
        %v1251 = vmin.f32 %v1176, %v1182
        %v1252 = vmin.f32 %v1179, %v1185
        %v1253 = vmin.f32 %v1251, %v1188
        %v1254 = vmin.f32 %v1252, %v1191
        %v1255 = vmin.f32 %v1253, %v1194
        %v1256 = vmin.f32 %v1254, %v1197
        %v1257 = vmin.f32 %v1255, %v1200
        %v1258 = vmin.f32 %v1256, %v1203
        %v1259 = vmin.f32 %v1257, %v1206
        %v1260 = vmin.f32 %v1258, %v1209
        %v1261 = vmin.f32 %v1259, %v1212
        %v1262 = vmin.f32 %v1260, %v1215
        %v1263 = vmin.f32 %v1261, %v1218
        %v1264 = vmin.f32 %v1262, %v1221
        %v1265 = vmin.f32 %v1263, %v1224
        %v1266 = vmin.f32 %v1264, %v1227
        %v1267 = vmin.f32 %v1265, %v1230
        %v1268 = vmin.f32 %v1266, %v1233
        %v1269 = vmin.f32 %v1267, %v1236
        %v1270 = vmin.f32 %v1268, %v1239
        %v1271 = vmin.f32 %v1269, %v1242
        %v1272 = vmin.f32 %v1270, %v1245
        %v1273 = vmin.f32 %v1271, %v1248
        %v1274 = vmin.f32 %v1273, %v1272
        %v1275 = vrot.slane %v1274, 4
        %v1276 = vmin.f32 %v1274, %v1275
        %v1277 = vrot.slane %v1276, 2
        %v1278 = vmin.f32 %v1276, %v1277
        %v1279 = vrot.slane %v1278, 1
        %v1280 = vmin.f32 %v1278, %v1279
        %v1281 = vmin.f32 %v1177, %v1183
        %v1282 = vmin.f32 %v1180, %v1186
        %v1283 = vmin.f32 %v1281, %v1189
        %v1284 = vmin.f32 %v1282, %v1192
        %v1285 = vmin.f32 %v1283, %v1195
        %v1286 = vmin.f32 %v1284, %v1198
        %v1287 = vmin.f32 %v1285, %v1201
        %v1288 = vmin.f32 %v1286, %v1204
        %v1289 = vmin.f32 %v1287, %v1207
        %v1290 = vmin.f32 %v1288, %v1210
        %v1291 = vmin.f32 %v1289, %v1213
        %v1292 = vmin.f32 %v1290, %v1216
        %v1293 = vmin.f32 %v1291, %v1219
        %v1294 = vmin.f32 %v1292, %v1222
        %v1295 = vmin.f32 %v1293, %v1225
        %v1296 = vmin.f32 %v1294, %v1228
        %v1297 = vmin.f32 %v1295, %v1231
        %v1298 = vmin.f32 %v1296, %v1234
        %v1299 = vmin.f32 %v1297, %v1237
        %v1300 = vmin.f32 %v1298, %v1240
        %v1301 = vmin.f32 %v1299, %v1243
        %v1302 = vmin.f32 %v1300, %v1246
        %v1303 = vmin.f32 %v1301, %v1249
        %v1304 = vmin.f32 %v1303, %v1302
        %v1305 = vrot.slane %v1304, 4
        %v1306 = vmin.f32 %v1304, %v1305
        %v1307 = vrot.slane %v1306, 2
        %v1308 = vmin.f32 %v1306, %v1307
        %v1309 = vrot.slane %v1308, 1
        %v1310 = vmin.f32 %v1308, %v1309
        %v1311 = vmin.f32 %v1178, %v1184
        %v1312 = vmin.f32 %v1181, %v1187
        %v1313 = vmin.f32 %v1311, %v1190
        %v1314 = vmin.f32 %v1312, %v1193
        %v1315 = vmin.f32 %v1313, %v1196
        %v1316 = vmin.f32 %v1314, %v1199
        %v1317 = vmin.f32 %v1315, %v1202
        %v1318 = vmin.f32 %v1316, %v1205
        %v1319 = vmin.f32 %v1317, %v1208
        %v1320 = vmin.f32 %v1318, %v1211
        %v1321 = vmin.f32 %v1319, %v1214
        %v1322 = vmin.f32 %v1320, %v1217
        %v1323 = vmin.f32 %v1321, %v1220
        %v1324 = vmin.f32 %v1322, %v1223
        %v1325 = vmin.f32 %v1323, %v1226
        %v1326 = vmin.f32 %v1324, %v1229
        %v1327 = vmin.f32 %v1325, %v1232
        %v1328 = vmin.f32 %v1326, %v1235
        %v1329 = vmin.f32 %v1327, %v1238
        %v1330 = vmin.f32 %v1328, %v1241
        %v1331 = vmin.f32 %v1329, %v1244
        %v1332 = vmin.f32 %v1330, %v1247
        %v1333 = vmin.f32 %v1331, %v1250
        %v1334 = vmin.f32 %v1333, %v1332
        %v1335 = vrot.slane %v1334, 4
        %v1336 = vmin.f32 %v1334, %v1335
        %v1337 = vrot.slane %v1336, 2
        %v1338 = vmin.f32 %v1336, %v1337
        %v1339 = vrot.slane %v1338, 1
        %v1340 = vmin.f32 %v1338, %v1339
        %p1341 = scmp.eq.s32.totalorder %s23, 0
        // Predicated region
        $region29: #{tpu_custom_call.1} parent=27 // pred_check
          %p1342 = pneg %p1341
        $region30: #{tpu_custom_call.1} parent=27 // pred_check_branch
          %1344 = sbr.rel (%p1342) target = $region32
        $region31: #{tpu_custom_call.1} parent=27 // pred_region
          %v1348 = vcombine.low %v1280, %v1310
          %v1350 = vunpack.c.l.s4 1966171168
          %v1351 = vunpack.c.0.s8 %v1350
          %v1352 = vlaneseq
          %v1353 = vshrl.u32 %v1352, 7
          %v1354 = vsub.s32 %v1351, %v1353
          %v1355 = vrot.slane %v1348, %v1354
          %v1357 = vunpack.c.l.s4 1966171168
          %v1358 = vunpack.c.0.s8 %v1357
          %v1359 = vlaneseq
          %v1360 = vshrl.u32 %v1359, 7
          %v1361 = vsub.s32 %v1358, %v1360
          %v1362 = vrot.slane %v1340, %v1361
          %v1363 = vcombine.low %v1355, %v1362
          %v1365 = vunpack.c.l.s4 1966171168
          %v1366 = vunpack.c.0.s8 %v1365
          %v1367 = vlaneseq
          %v1368 = vshrl.u32 %v1367, 7
          %v1369 = vsub.s32 %v1366, %v1368
          %v1370 = vrot.slane %v1363, %v1369
          %v1372 = vlaneseq
          %vm1373 = vcmp.ge.s32.totalorder %v1372, 0
          %vm1374 = vcmp.lt.s32.totalorder %v1372, 384
          %vm1375 = vmand %vm1373, %vm1374
          %1376 = vst.msk [vmem:[%s194] sm:$0x7] %vm1375, %v1370
        $region32: #{tpu_custom_call.1} parent=27 // pred_fallthru
          _
        %p1377 = scmp.gt.s32.totalorder %s23, 0
        // Predicated region
        $region33: #{tpu_custom_call.1} parent=27 // pred_check
          %p1378 = pneg %p1377
        $region34: #{tpu_custom_call.1} parent=27 // pred_check_branch
          %1380 = sbr.rel (%p1378) target = $region36
        $region35: #{tpu_custom_call.1} parent=27 // pred_region
          %v1381 = vld [vmem:[%s194] sm:$0x7]
          %v1385 = vcombine.low %v1280, %v1310
          %v1387 = vunpack.c.l.s4 1966171168
          %v1388 = vunpack.c.0.s8 %v1387
          %v1389 = vlaneseq
          %v1390 = vshrl.u32 %v1389, 7
          %v1391 = vsub.s32 %v1388, %v1390
          %v1392 = vrot.slane %v1385, %v1391
          %v1394 = vunpack.c.l.s4 1966171168
          %v1395 = vunpack.c.0.s8 %v1394
          %v1396 = vlaneseq
          %v1397 = vshrl.u32 %v1396, 7
          %v1398 = vsub.s32 %v1395, %v1397
          %v1399 = vrot.slane %v1340, %v1398
          %v1400 = vcombine.low %v1392, %v1399
          %v1402 = vunpack.c.l.s4 1966171168
          %v1403 = vunpack.c.0.s8 %v1402
          %v1404 = vlaneseq
          %v1405 = vshrl.u32 %v1404, 7
          %v1406 = vsub.s32 %v1403, %v1405
          %v1407 = vrot.slane %v1400, %v1406
          %v1409 = vmin.f32 %v1381, %v1407
          %v1410 = vlaneseq
          %vm1411 = vcmp.ge.s32.totalorder %v1410, 0
          %vm1412 = vcmp.lt.s32.totalorder %v1410, 384
          %vm1413 = vmand %vm1411, %vm1412
          %1414 = vst.msk [vmem:[%s194] sm:$0x7] %vm1413, %v1409
        $region36: #{tpu_custom_call.1} parent=27 // pred_fallthru
          _
        %s1415 = sand.u32 %s101, 1
        %s1416 = scalar_lea.sflag [#allocation3], %s1415
        %s1417 = sand.u32 %s101, 1
        %s1418 = smul.addr %s1417, 3
        %s1419 = scalar_lea.vmem [#allocation2], %s1418
        // Predicated region
        $region37: #{tpu_custom_call.1} parent=27 // pred_check
          %p1420 = pneg %p111
        $region38: #{tpu_custom_call.1} parent=27 // pred_check_branch
          %1422 = sbr.rel (%p1420) target = $region40
        $region39: #{tpu_custom_call.1} parent=27 // pred_region
          %s1423 = smul.u32 3, %s22
          %s1425 = ssub.s32 48, 48
          %1426 = vsyncadd %s1416, %s1425
          %s1427 = smul.addr %s21, 3
          %s1428 = sadd.s32 %s1423, %s1427
          %s1429 = smul.addr %s1428, 16
          %s1430 = scalar_lea.hbm %s2, %s1429
          %s1432 = sshll.u32 %s1419, 4
          %s1433 = int_to_ptr.vmem [resolvable:$true] %s1432
          %1435 = dma.vmem_to_hbm [thread:$0]  %s1433, 48, %s1430, %s1416
        $region40: #{tpu_custom_call.1} parent=27 // pred_fallthru
          _
      $region28: #{tpu_custom_call.1} parent=5 // pred_fallthru
        _
      %p1436 = scmp.le.s32.totalorder 2, %s11
      // Predicated region
      $region41: #{tpu_custom_call.1} parent=5 // pred_check
        %p1437 = pneg %p1436
      $region42: #{tpu_custom_call.1} parent=5 // pred_check_branch
        %1439 = sbr.rel (%p1437) target = $region44
      $region43: #{tpu_custom_call.1} parent=5 // pred_region
        %s1440 = ssub.s32 %s11, 2
        // Predicated region
        $region45: #{tpu_custom_call.1} parent=43 // pred_check
          %p1441 = pneg %p117
        $region46: #{tpu_custom_call.1} parent=43 // pred_check_branch
          %1443 = sbr.rel (%p1441) target = $region48
        $region47: #{tpu_custom_call.1} parent=43 // pred_region
          %s1444 = sand.u32 %s102, 1
          %s1445 = scalar_lea.sflag [#allocation3], %s1444
          %s1446 = sand.u32 %s102, 1
          %s1447 = smul.addr %s1446, 3
          %s1448 = scalar_lea.vmem [#allocation2], %s1447
          %1449 = dma.done %s1445, 48
        $region48: #{tpu_custom_call.1} parent=43 // pred_fallthru
          _
      $region44: #{tpu_custom_call.1} parent=5 // pred_fallthru
        _
    $region6: #{tpu_custom_call.1} parent=1 // loop_footer
      %s15 = sadd.s32 1, %s11
    $region7: #{tpu_custom_call.1} parent=1 // loop_footer_branch
      %10 = sbr.rel target = $region3
    $region8: #{tpu_custom_call.1} parent=1 // loop_exit
      _
    %1450 = vsyncpa [#allocation3], 1
    %s1451 = scalar_lea.sflag [#allocation3], 1
    %1452 = vsyncpa %s1451, 1

</llo_original>
